<compile_context>
chip_gen: v6e
topology: v6e:2x2x1
jax: 0.10.0
libtpu: 0.0.40
codegen_flags: <defaults>
</compile_context>

<pallas_src>
import functools

import jax
import jax.numpy as jnp
import numpy as np
from jax.experimental import pallas as pl
from jax.experimental.pallas import tpu as pltpu


def _round_up(a: int, m: int) -> int:
    return ((a + m - 1) // m) * m


def _make_kan_kernel(num_kernels: int):
    K = num_kernels

    def kan_kernel(x_ref, c_ref, s_ref, w_ref, bias_ref, o_ref):
        # x_ref:    (TB, I)   f32       input tile (batch on sublanes)
        # c_ref:    (1, K*I)  f32       centers[k] repeated per input dim (idx k*I+i)
        # s_ref:    (1, K*I)  f32       -1/(2*widths[k]^2) repeated likewise
        # w_ref:    (K*I, TO) f32/bf16  weights[o,i,k] -> w[k*I+i, o] tile (O-tiled)
        # bias_ref: (1, TO)   f32       bias tile (zero in padded lanes)
        # o_ref:    (TB, TO)  f32       output tile (lane-dense, TO % 128 == 0)
        x = x_ref[...]                                       # (TB, I)
        x_rep = jnp.tile(x, (1, K))                          # (TB, K*I): one broadcast+reshape
        diff = x_rep - c_ref[...]                            # (TB, K*I)
        kern = jnp.exp(diff * diff * s_ref[...])             # EUP exp only, no divide
        out = jnp.dot(kern.astype(w_ref.dtype), w_ref[...],
                      preferred_element_type=jnp.float32)    # MXU, f32 accumulate
        o_ref[...] = out + bias_ref[...]

    return kan_kernel


def prepare_kan_params(weights, bias, centers, widths, *,
                       weight_dtype=jnp.float32, tile_o=None):
    """One-time parameter prep (amortize across forward calls).

    weights: (O, I, K), bias: (O,), centers/widths: (K,).
    Returns ((c_full, s_full, w_flat, bias_pad), static_kwargs).
    """
    O, I, K = weights.shape
    KI = K * I

    # Fused (k, i) ordering: index = k*I + i.
    c_full = jnp.repeat(centers.astype(jnp.float32), I).reshape(1, KI)
    scale = -1.0 / (2.0 * widths.astype(jnp.float32) ** 2)    # precompute -1/(2w^2)
    s_full = jnp.repeat(scale, I).reshape(1, KI)

    # Output tile: lane-dense multiple of 128; cap weight tile to ~8 MiB so the
    # resident working set fits v7x's smaller VMEM.
    if tile_o is None:
        o128 = _round_up(O, 128)
        cap = max(128, (8 * 1024 * 1024 // (4 * KI)) // 128 * 128)
        tile_o = min(o128, cap)
    o_pad = _round_up(O, tile_o)

    w_flat = jnp.transpose(weights, (2, 1, 0)).reshape(KI, O).astype(weight_dtype)
    w_flat = jnp.pad(w_flat, ((0, 0), (0, o_pad - O)))        # zero-filled pad columns
    bias_pad = jnp.pad(bias.astype(jnp.float32), (0, o_pad - O)).reshape(1, o_pad)

    static = dict(out_dim=O, num_kernels=K, tile_o=tile_o)
    return (c_full, s_full, w_flat, bias_pad), static


def kan_layer_forward(x, c_full, s_full, w_flat, bias_pad, *,
                      out_dim, num_kernels, tile_o, tile_b=None):
    """x: (B, I) f32. Prepared params from prepare_kan_params. Returns (B, out_dim) f32."""
    B, I = x.shape
    KI = c_full.shape[1]
    assert KI == num_kernels * I
    o_pad = w_flat.shape[1]

    # Batch tile: 256 fills the v6e/v7x MXU; small batches round up to a sublane multiple.
    if tile_b is None:
        tile_b = 256 if B >= 256 else _round_up(max(B, 1), 8)
    b_rows = _round_up(B, tile_b)
    x_p = x if b_rows == B else jnp.pad(x, ((0, b_rows - B), (0, 0)))

    grid = (b_rows // tile_b, o_pad // tile_o)

    cost = pl.CostEstimate(
        flops=2 * b_rows * KI * o_pad,
        transcendentals=b_rows * KI * grid[1],
        bytes_accessed=(4 * (b_rows * I + 2 * KI + o_pad + b_rows * o_pad)
                        + int(np.dtype(w_flat.dtype).itemsize) * KI * o_pad),
    )

    out = pl.pallas_call(
        _make_kan_kernel(num_kernels),
        out_shape=jax.ShapeDtypeStruct((b_rows, o_pad), jnp.float32),
        grid=grid,
        in_specs=[
            pl.BlockSpec((tile_b, I), lambda b, o: (b, 0)),     # x: batch-tiled
            pl.BlockSpec((1, KI), lambda b, o: (0, 0)),         # centers (resident)
            pl.BlockSpec((1, KI), lambda b, o: (0, 0)),         # -1/(2w^2) (resident)
            pl.BlockSpec((KI, tile_o), lambda b, o: (0, o)),    # weights: O-tiled
            pl.BlockSpec((1, tile_o), lambda b, o: (0, o)),     # bias
        ],
        out_specs=pl.BlockSpec((tile_b, tile_o), lambda b, o: (b, o)),
        compiler_params=pltpu.CompilerParams(
            dimension_semantics=("parallel", "parallel"),
            vmem_limit_bytes=32 * 1024 * 1024,
        ),
        cost_estimate=cost,
    )(x_p, c_full, s_full, w_flat, bias_pad)

    return out[:B, :out_dim]


def kan_layer_reference(x, weights, bias, centers, widths):
    """Pure-JAX transliteration of the PyTorch forward, for verification."""
    x_expanded = x[:, :, None]                                   # (B, I, 1)
    c = centers.reshape(1, 1, -1)
    w = widths.reshape(1, 1, -1)
    kernels = jnp.exp(-((x_expanded - c) ** 2) / (2.0 * w ** 2))  # (B, I, K)
    weighted = (kernels[:, None, :, :] * weights[None, :, :, :]).sum(axis=(2, 3))
    return weighted + bias


if __name__ == "__main__":
    # Small shapes consistent with the module's forward: x is (batch, input_dim).
    B, input_dim, output_dim, num_kernels = 8, 16, 32, 8

    key = jax.random.PRNGKey(0)
    kx, kw = jax.random.split(key)

    x = jax.random.normal(kx, (B, input_dim), dtype=jnp.float32)

    # Deterministic parameter init mirroring __init__:
    weights = jax.random.normal(kw, (output_dim, input_dim, num_kernels), dtype=jnp.float32)
    bias = jnp.zeros((output_dim,), dtype=jnp.float32)
    centers = jnp.linspace(-1.0, 1.0, num_kernels, dtype=jnp.float32)
    widths = jnp.ones((num_kernels,), dtype=jnp.float32) * 0.1

    # One-time parameter prep; forward is jit'd so the (tiny) glue fuses into one program.
    params, static = prepare_kan_params(weights, bias, centers, widths)
    fwd = jax.jit(functools.partial(kan_layer_forward, **static))

    out = jax.block_until_ready(fwd(x, *params))
    ref = jax.block_until_ready(kan_layer_reference(x, weights, bias, centers, widths))
    if not np.allclose(np.asarray(out), np.asarray(ref), rtol=1e-4, atol=1e-4):
        raise AssertionError("Pallas KANLayer output mismatch vs reference (f32 path)")

    # bf16-weight path (halves weight DMA, f32 MXU accumulate). Exercised for
    # compile/run health; exact match is only expected at bf16 tolerance.
    params_bf16, static_bf16 = prepare_kan_params(weights, bias, centers, widths,
                                                  weight_dtype=jnp.bfloat16)
    fwd_bf16 = jax.jit(functools.partial(kan_layer_forward, **static_bf16))
    out_bf16 = jax.block_until_ready(fwd_bf16(x, *params_bf16))
    if out_bf16.shape != (B, output_dim) or not np.all(np.isfinite(np.asarray(out_bf16))):
        raise AssertionError("Pallas KANLayer bf16 path produced invalid output")

    print("KERNEL_OK")
</pallas_src>

<mosaic_0001>
module attributes {stable_mosaic.version = 11 : i64} {
  func.func @kan_kernel(%arg0: i32, %arg1: i32, %arg2: memref<8x16xf32, #tpu.memory_space<vmem>>, %arg3: memref<1x128xf32, #tpu.memory_space<vmem>>, %arg4: memref<1x128xf32, #tpu.memory_space<vmem>>, %arg5: memref<128x128xf32, #tpu.memory_space<vmem>>, %arg6: memref<1x128xf32, #tpu.memory_space<vmem>>, %arg7: memref<8x128xf32, #tpu.memory_space<vmem>>) attributes {dimension_semantics = [#tpu.dimension_semantics<parallel>, #tpu.dimension_semantics<parallel>], iteration_bounds = array<i64: 1, 1>, scalar_prefetch = 0 : i64, scratch_operands = 0 : i64, tpu.core_type = #tpu.core_type<tc>, window_params = [{transform_indices = @transform_0, window_bounds = array<i64: 8, 16>}, {pipeline_mode = #tpu.pipeline_mode<synchronous>, transform_indices = @transform_1, window_bounds = array<i64: 1, 128>}, {pipeline_mode = #tpu.pipeline_mode<synchronous>, transform_indices = @transform_2, window_bounds = array<i64: 1, 128>}, {transform_indices = @transform_3, window_bounds = array<i64: 128, 128>}, {transform_indices = @transform_4, window_bounds = array<i64: 1, 128>}, {transform_indices = @transform_5, window_bounds = array<i64: 8, 128>}]} {
    %c0 = arith.constant 0 : index
    %c0_0 = arith.constant 0 : index
    %0 = vector.load %arg2[%c0, %c0_0] : memref<8x16xf32, #tpu.memory_space<vmem>>, vector<8x16xf32>
    %1 = tpu.concatenate %0, %0, %0, %0, %0, %0, %0, %0 in 1 : vector<8x16xf32>, vector<8x16xf32>, vector<8x16xf32>, vector<8x16xf32>, vector<8x16xf32>, vector<8x16xf32>, vector<8x16xf32>, vector<8x16xf32> -> vector<8x128xf32>
    %c0_1 = arith.constant 0 : index
    %c0_2 = arith.constant 0 : index
    %2 = vector.load %arg3[%c0_1, %c0_2] : memref<1x128xf32, #tpu.memory_space<vmem>>, vector<1x128xf32>
    %3 = vector.broadcast %2 : vector<1x128xf32> to vector<8x128xf32>
    %4 = arith.subf %1, %3 : vector<8x128xf32>
    %5 = arith.mulf %4, %4 : vector<8x128xf32>
    %c0_3 = arith.constant 0 : index
    %c0_4 = arith.constant 0 : index
    %6 = vector.load %arg4[%c0_3, %c0_4] : memref<1x128xf32, #tpu.memory_space<vmem>>, vector<1x128xf32>
    %7 = vector.broadcast %6 : vector<1x128xf32> to vector<8x128xf32>
    %8 = arith.mulf %5, %7 : vector<8x128xf32>
    %9 = math.exp %8 : vector<8x128xf32>
    %c0_5 = arith.constant 0 : index
    %c0_6 = arith.constant 0 : index
    %10 = vector.load %arg5[%c0_5, %c0_6] : memref<128x128xf32, #tpu.memory_space<vmem>>, vector<128x128xf32>
    %cst = arith.constant dense<0.000000e+00> : vector<8x128xf32>
    %11 = tpu.matmul %9, %10, %cst {dimension_numbers = #tpu.dot_dimension_numbers<[1], [0], [0], [1], [0, 0, 1, 1], [], []>} : vector<8x128xf32>, vector<128x128xf32>, vector<8x128xf32> -> vector<8x128xf32>
    %c0_7 = arith.constant 0 : index
    %c0_8 = arith.constant 0 : index
    %12 = vector.load %arg6[%c0_7, %c0_8] : memref<1x128xf32, #tpu.memory_space<vmem>>, vector<1x128xf32>
    %13 = vector.broadcast %12 : vector<1x128xf32> to vector<8x128xf32>
    %14 = arith.addf %11, %13 : vector<8x128xf32>
    %c0_9 = arith.constant 0 : index
    %c0_10 = arith.constant 0 : index
    %15 = vector.load %arg7[%c0_9, %c0_10] : memref<8x128xf32, #tpu.memory_space<vmem>>, vector<8x128xf32>
    tpu.vector_store %arg7[%c0_9, %c0_10], %14 {strides = array<i32>} : memref<8x128xf32, #tpu.memory_space<vmem>>, vector<8x128xf32>,
    return
  }
  func.func @transform_0(%arg0: i32, %arg1: i32) -> (i32, i32) {
    %c0_i32 = arith.constant 0 : i32
    %c0_i32_0 = arith.constant 0 : i32
    return %arg0, %c0_i32 : i32, i32
  }
  func.func @transform_1(%arg0: i32, %arg1: i32) -> (i32, i32) {
    %c0_i32 = arith.constant 0 : i32
    %c0_i32_0 = arith.constant 0 : i32
    %c0_i32_1 = arith.constant 0 : i32
    return %c0_i32, %c0_i32_0 : i32, i32
  }
  func.func @transform_2(%arg0: i32, %arg1: i32) -> (i32, i32) {
    %c0_i32 = arith.constant 0 : i32
    %c0_i32_0 = arith.constant 0 : i32
    %c0_i32_1 = arith.constant 0 : i32
    return %c0_i32, %c0_i32_0 : i32, i32
  }
  func.func @transform_3(%arg0: i32, %arg1: i32) -> (i32, i32) {
    %c0_i32 = arith.constant 0 : i32
    %c0_i32_0 = arith.constant 0 : i32
    return %c0_i32, %arg1 : i32, i32
  }
  func.func @transform_4(%arg0: i32, %arg1: i32) -> (i32, i32) {
    %c0_i32 = arith.constant 0 : i32
    %c0_i32_0 = arith.constant 0 : i32
    return %c0_i32, %arg1 : i32, i32
  }
  func.func @transform_5(%arg0: i32, %arg1: i32) -> (i32, i32) {
    %c0_i32 = arith.constant 0 : i32
    return %arg0, %arg1 : i32, i32
  }
}

</mosaic_0001>

<llo_original>
// kernel: kan_layer_forward.1
$region0: #{kan_layer_forward.1}
  #allocation0 [shape = 'u32[]', space=smem, size = 0x4, offset = 0x4, fixed_abs, tag = 'smem constant byte address 0x4 - core index']
  #allocation1 [shape = 'u32[144,128]{1,0:T(1,128)}', space=vmem, size = 0x12000, scoped, tag = 'internal scratch']
  %s0 = inlined_call_operand.hbm [shape: f32[8,16], index: 0, kind: input, shape index: {}]
  %s1 = inlined_call_operand.vmem [shape: f32[1,128], index: 1, kind: input, shape index: {}]
  %s2 = inlined_call_operand.vmem [shape: f32[1,128], index: 2, kind: input, shape index: {}]
  %s3 = inlined_call_operand.hbm [shape: f32[128,128], index: 3, kind: input, shape index: {}]
  %s4 = inlined_call_operand.vmem [shape: f32[1,128], index: 4, kind: input, shape index: {}]
  %s5 = inlined_call_operand.hbm [shape: f32[8,128], index: 5, kind: output, shape index: {}]
  %s6 = sld [smem:[#allocation0]]
  $region38: #{kan_layer_forward.1} parent=0
    _
  %s8 = ssub.s32 1, %s6
  %s9 = scalar_select 0, %s8, %s6
  $region1: #{kan_layer_forward.1} parent=0
    #allocation2 [shape = 'u8[4096]{0}', space=vmem, size = 0x1000, scoped, tag = 'input window, operand 0, single buffered']
    #allocation3 [shape = 's32[1]{0}', space=sflag, size = 0x4, scoped, tag = 'scoped memory for kan_layer_forward.1']
    #allocation4 [shape = 's32[1]{0}', space=sflag, size = 0x4, scoped, tag = 'scoped memory for kan_layer_forward.1']
    #allocation5 [shape = 'u8[65536]{0}', space=vmem, size = 0x10000, scoped, tag = 'input window, operand 3, single buffered']
    #allocation6 [shape = 's32[1]{0}', space=sflag, size = 0x4, scoped, tag = 'scoped memory for kan_layer_forward.1']
    #allocation7 [shape = 'u8[4096]{0}', space=vmem, size = 0x1000, scoped, tag = 'output window, operand 0, single buffered']
    %10 = vsyncpa [#allocation3], 0
    %11 = vsyncpa [#allocation6], 0
    %12 = vsyncpa [#allocation4], 0
    // Predicated region
    $region2: #{kan_layer_forward.1} parent=1 // pred_check
      _
    $region3: #{kan_layer_forward.1} parent=1 // pred_check_branch
      %14 = sbr.rel (0) target = $region5
    $region4: #{kan_layer_forward.1} parent=1 // pred_region
      %s16 = ssub.s32 128, 128
      %17 = vsyncadd [#allocation3], %s16
      %s19 = sshll.u32 [#allocation2], 4
      %s20 = int_to_ptr.vmem [resolvable:$true] %s19
      %22 = dma.hbm_to_vmem [thread:$0]  %s0, 128, %s20, [#allocation3]
    $region5: #{kan_layer_forward.1} parent=1 // pred_fallthru
      _
    // Predicated region
    $region6: #{kan_layer_forward.1} parent=1 // pred_check
      _
    $region7: #{kan_layer_forward.1} parent=1 // pred_check_branch
      %24 = sbr.rel (0) target = $region9
    $region8: #{kan_layer_forward.1} parent=1 // pred_region
      _
    $region9: #{kan_layer_forward.1} parent=1 // pred_fallthru
      _
    // Predicated region
    $region10: #{kan_layer_forward.1} parent=1 // pred_check
      _
    $region11: #{kan_layer_forward.1} parent=1 // pred_check_branch
      %26 = sbr.rel (0) target = $region13
    $region12: #{kan_layer_forward.1} parent=1 // pred_region
      _
    $region13: #{kan_layer_forward.1} parent=1 // pred_fallthru
      _
    // Predicated region
    $region14: #{kan_layer_forward.1} parent=1 // pred_check
      _
    $region15: #{kan_layer_forward.1} parent=1 // pred_check_branch
      %28 = sbr.rel (0) target = $region17
    $region16: #{kan_layer_forward.1} parent=1 // pred_region
      %s30 = ssub.s32 2048, 2048
      %31 = vsyncadd [#allocation6], %s30
      %s32 = sshll.u32 [#allocation5], 4
      %s33 = int_to_ptr.vmem [resolvable:$true] %s32
      %38 = dma.hbm_to_vmem [thread:$0]  %s3, 2048, %s33, [#allocation6], 128, 128, 8
    $region17: #{kan_layer_forward.1} parent=1 // pred_fallthru
      _
    // Predicated region
    $region18: #{kan_layer_forward.1} parent=1 // pred_check
      _
    $region19: #{kan_layer_forward.1} parent=1 // pred_check_branch
      %40 = sbr.rel (0) target = $region21
    $region20: #{kan_layer_forward.1} parent=1 // pred_region
      _
    $region21: #{kan_layer_forward.1} parent=1 // pred_fallthru
      _
    // Predicated region
    $region22: #{kan_layer_forward.1} parent=1 // pred_check
      _
    $region23: #{kan_layer_forward.1} parent=1 // pred_check_branch
      %42 = sbr.rel (0) target = $region25
    $region24: #{kan_layer_forward.1} parent=1 // pred_region
      %43 = dma.done [#allocation3], 128
    $region25: #{kan_layer_forward.1} parent=1 // pred_fallthru
      _
    // Predicated region
    $region26: #{kan_layer_forward.1} parent=1 // pred_check
      _
    $region27: #{kan_layer_forward.1} parent=1 // pred_check_branch
      %45 = sbr.rel (0) target = $region29
    $region28: #{kan_layer_forward.1} parent=1 // pred_region
      %46 = dma.done [#allocation6], 2048
    $region29: #{kan_layer_forward.1} parent=1 // pred_fallthru
      _
    %v47 = vld [vmem:[#allocation2] sm:$0xff]
    %49 = vrot.lane.b32.xlu0 %v47, 16
    %v50 = vpop.permute.xlu0 %49
    %52 = vrot.lane.b32.xlu0 %v47, 32
    %v53 = vpop.permute.xlu0 %52
    %55 = vrot.lane.b32.xlu0 %v47, 48
    %v56 = vpop.permute.xlu0 %55
    %58 = vrot.lane.b32.xlu0 %v47, 64
    %v59 = vpop.permute.xlu0 %58
    %61 = vrot.lane.b32.xlu0 %v47, 80
    %v62 = vpop.permute.xlu0 %61
    %64 = vrot.lane.b32.xlu0 %v47, 96
    %v65 = vpop.permute.xlu0 %64
    %67 = vrot.lane.b32.xlu0 %v47, 112
    %v68 = vpop.permute.xlu0 %67
    %vm70 = vcmask 130048
    %v71 = vsel %vm70, %v47, %v50
    %vm72 = vcmask 261120
    %v73 = vsel %vm72, %v71, %v53
    %vm74 = vcmask 392192
    %v75 = vsel %vm74, %v73, %v56
    %vm76 = vcmask 523264
    %v77 = vsel %vm76, %v75, %v59
    %vm78 = vcmask 654336
    %v79 = vsel %vm78, %v77, %v62
    %vm80 = vcmask 785408
    %v81 = vsel %vm80, %v79, %v65
    %vm82 = vcmask 916480
    %v83 = vsel %vm82, %v81, %v68
    %v84 = vld [vmem:[%s1] sm:$0x1]
    %v86 = vlaneseq
    %v87 = vshrl.u32 %v86, 7
    %v88 = vsub.s32 0, %v87
    %v89 = vrot.slane %v84, %v88
    %v91 = vsub.f32 %v83, %v89
    %v92 = vmul.f32 %v91, %v91
    %v93 = vld [vmem:[%s2] sm:$0x1]
    %v95 = vlaneseq
    %v96 = vshrl.u32 %v95, 7
    %v97 = vsub.s32 0, %v96
    %v98 = vrot.slane %v93, %v97
    %v100 = vmul.f32 %v92, %v98
    %v101 = vmul.f32 %v100, 1.442695
    %v102 = vpow.pop %v101
    %v103 = vld [vmem:[#allocation5] sm:$0xff]
    %v104 = vld [vmem:[#allocation5 + $0x8] sm:$0xff]
    %v105 = vld [vmem:[#allocation5 + $0x10] sm:$0xff]
    %v106 = vld [vmem:[#allocation5 + $0x18] sm:$0xff]
    %v107 = vld [vmem:[#allocation5 + $0x20] sm:$0xff]
    %v108 = vld [vmem:[#allocation5 + $0x28] sm:$0xff]
    %v109 = vld [vmem:[#allocation5 + $0x30] sm:$0xff]
    %v110 = vld [vmem:[#allocation5 + $0x38] sm:$0xff]
    %v111 = vld [vmem:[#allocation5 + $0x40] sm:$0xff]
    %v112 = vld [vmem:[#allocation5 + $0x48] sm:$0xff]
    %v113 = vld [vmem:[#allocation5 + $0x50] sm:$0xff]
    %v114 = vld [vmem:[#allocation5 + $0x58] sm:$0xff]
    %v115 = vld [vmem:[#allocation5 + $0x60] sm:$0xff]
    %v116 = vld [vmem:[#allocation5 + $0x68] sm:$0xff]
    %v117 = vld [vmem:[#allocation5 + $0x70] sm:$0xff]
    %v118 = vld [vmem:[#allocation5 + $0x78] sm:$0xff]
    %v119 = vld [vmem:[%s4] sm:$0x1]
    %v121 = vlaneseq
    %v122 = vshrl.u32 %v121, 7
    %v123 = vsub.s32 0, %v122
    %v124 = vrot.slane %v119, %v123
    %126 = vmatprep.subr.mxu0 0.0
    %127 = vmatpush1.msra.mxu0 %v118
    %128 = vmatprep.subr.mxu0 0.0
    %129 = vmatpush1.msra.mxu0 %v117
    %130 = vmatprep.subr.mxu0 0.0
    %131 = vmatpush1.msra.mxu0 %v116
    %132 = vmatprep.subr.mxu0 0.0
    %133 = vmatpush1.msra.mxu0 %v115
    %134 = vmatprep.subr.mxu0 0.0
    %135 = vmatpush1.msra.mxu0 %v114
    %136 = vmatprep.subr.mxu0 0.0
    %137 = vmatpush1.msra.mxu0 %v113
    %138 = vmatprep.subr.mxu0 0.0
    %139 = vmatpush1.msra.mxu0 %v112
    %140 = vmatprep.subr.mxu0 0.0
    %141 = vmatpush1.msra.mxu0 %v111
    %142 = vmatprep.subr.mxu0 0.0
    %143 = vmatpush1.msra.mxu0 %v110
    %144 = vmatprep.subr.mxu0 0.0
    %145 = vmatpush1.msra.mxu0 %v109
    %146 = vmatprep.subr.mxu0 0.0
    %147 = vmatpush1.msra.mxu0 %v108
    %148 = vmatprep.subr.mxu0 0.0
    %149 = vmatpush1.msra.mxu0 %v107
    %150 = vmatprep.subr.mxu0 0.0
    %151 = vmatpush1.msra.mxu0 %v106
    %152 = vmatprep.subr.mxu0 0.0
    %153 = vmatpush1.msra.mxu0 %v105
    %154 = vmatprep.subr.mxu0 0.0
    %155 = vmatpush1.msra.mxu0 %v104
    %156 = vmatprep.subr.mxu0 0.0
    %157 = vmatpush1.msra.mxu0 %v103
    %158 = vmatprep.subr.mxu0 0.0
    %159 = vmatpush2.msra.mxu0 0.0
    %160 = vmatprep.subr.mxu0 0.0
    %161 = vmatpush2.msra.mxu0 0.0
    %162 = vmatprep.subr.mxu0 0.0
    %163 = vmatpush2.msra.mxu0 0.0
    %164 = vmatprep.subr.mxu0 0.0
    %165 = vmatpush2.msra.mxu0 0.0
    %166 = vmatprep.subr.mxu0 0.0
    %167 = vmatpush2.msra.mxu0 0.0
    %168 = vmatprep.subr.mxu0 0.0
    %169 = vmatpush2.msra.mxu0 0.0
    %170 = vmatprep.subr.mxu0 0.0
    %171 = vmatpush2.msra.mxu0 0.0
    %172 = vmatprep.subr.mxu0 0.0
    %173 = vmatpush2.msra.mxu0 0.0
    %174 = vmatprep.subr.mxu0 0.0
    %175 = vmatpush2.msra.mxu0 0.0
    %176 = vmatprep.subr.mxu0 0.0
    %177 = vmatpush2.msra.mxu0 0.0
    %178 = vmatprep.subr.mxu0 0.0
    %179 = vmatpush2.msra.mxu0 0.0
    %180 = vmatprep.subr.mxu0 0.0
    %181 = vmatpush2.msra.mxu0 0.0
    %182 = vmatprep.subr.mxu0 0.0
    %183 = vmatpush2.msra.mxu0 0.0
    %184 = vmatprep.subr.mxu0 0.0
    %185 = vmatpush2.msra.mxu0 0.0
    %186 = vmatprep.subr.mxu0 0.0
    %187 = vmatpush2.msra.mxu0 0.0
    %188 = vmatprep.subr.mxu0 0.0
    %189 = vmatpush2.msra.mxu0 0.0
    %190 = vmatprep.mubr.f32.mxu0 0.0
    %191 = vmatmul.mubr.f32.gmra.mxu0 %v102
    %v192 = vpop.f32.mrf.mxu0
    %v193 = vadd.f32 %v124, %v192
    %v194 = vpop.f32.mrf.mxu0
    %195 = vdwg.mxu0
    %196 = vst [vmem:[#allocation7] sm:$0xff] %v193
    // Predicated region
    $region30: #{kan_layer_forward.1} parent=1 // pred_check
      _
    $region31: #{kan_layer_forward.1} parent=1 // pred_check_branch
      %198 = sbr.rel (0) target = $region33
    $region32: #{kan_layer_forward.1} parent=1 // pred_region
      %s200 = ssub.s32 128, 128
      %201 = vsyncadd [#allocation4], %s200
      %s203 = sshll.u32 [#allocation7], 4
      %s204 = int_to_ptr.vmem [resolvable:$true] %s203
      %206 = dma.vmem_to_hbm [thread:$0]  %s204, 128, %s5, [#allocation4]
    $region33: #{kan_layer_forward.1} parent=1 // pred_fallthru
      _
    // Predicated region
    $region34: #{kan_layer_forward.1} parent=1 // pred_check
      _
    $region35: #{kan_layer_forward.1} parent=1 // pred_check_branch
      %208 = sbr.rel (0) target = $region37
    $region36: #{kan_layer_forward.1} parent=1 // pred_region
      %209 = dma.done [#allocation4], 128
    $region37: #{kan_layer_forward.1} parent=1 // pred_fallthru
      _
    %210 = vsyncpa [#allocation3], 1
    %211 = vsyncpa [#allocation6], 1
    %212 = vsyncpa [#allocation4], 1

</llo_original>
